<compile_context>
chip_gen: v5e
topology: v5e:2x2
jax: 0.10.0
libtpu: 0.0.40
codegen_flags: <defaults>
</compile_context>

<pallas_src>
import jax
import jax.numpy as jnp
import numpy as np
from jax.experimental import pallas as pl
from jax.experimental.pallas import tpu as pltpu

# ----------------------------------------------------------------------------
# Synthetic config (mirrors cfg.model.* of the PyTorch module)
# ----------------------------------------------------------------------------
INPUT_DIM = 32                               # encoder_* / decoder input_dim
SPK_HID, SPK_LAT, SPK_NL = 32, 16, 2         # cfg.model.encoder_spk.*
EMO_HID, EMO_LAT, EMO_NL = 32, 16, 2         # cfg.model.encoder_emo.*
AUX_HID, AUX_NL, AUX_NCLS = 32, 2, 3         # cfg.model.classifier_aux.*, n_classes=3
DEC_HID, DEC_NL = 32, 2                      # cfg.model.decoder.*
N_EMOTIONS = 4                               # len(cfg.emotion)
BN_EPS = 1e-5
BATCH = 8

LANES = 128                                  # lane-dense working width (activations)
K_DIM = 64                                   # every weight block only reads rows < 64
LAT_DIM = SPK_LAT + EMO_LAT                  # 32, concat latent width
# output lane layout (also the layout of the stage-2 "lat" activation)
RECONST_LO, RECONST_HI = 0, INPUT_DIM                       # 0:32
ENC_LO, ENC_HI = INPUT_DIM, INPUT_DIM + N_EMOTIONS          # 32:36  (== latent pad lanes)
AUX_LO, AUX_HI = ENC_HI, ENC_HI + AUX_NCLS                  # 36:39

N_MATS = 6
N_VEC_ROWS = 10
# vec_table row layout:
#   0/1  enc layer-1 gamma/beta        2/3  enc layer-2 gamma/beta
#   4    latent bias (spk fc 0:16 | emo fc 16:32 | composed enc-proj bias 32:36)
#   5/6  aux+dec layer-1 gamma/beta    7/8  aux+dec layer-2 gamma/beta
#   9    final bias (dec fc 0:32 | aux fc 36:39)
# Invariant: gamma/beta rows are EXACTLY zero on all padded lanes (>= 64), so
# rsqrt(0+eps) on dead lanes is multiplied by 0 and nothing leaks.


# ----------------------------------------------------------------------------
# Kernel: whole forward, 6 MXU matmuls, lane-dense single store.
# ----------------------------------------------------------------------------
def separator_kernel(x_ref, w_ref, v_ref, out_ref):
    x = x_ref[...]                       # (B, 32)
    vt = v_ref[...]                      # (10, 128), hoisted once

    def bn_relu(h, row):
        # Training-mode BatchNorm1d with batch statistics (biased variance),
        # centered two-pass form for numerical safety.  The pre-BN linear
        # bias is omitted: it cancels exactly in (h - mu).
        mu = jnp.mean(h, axis=0, keepdims=True)
        d = h - mu
        var = jnp.mean(d * d, axis=0, keepdims=True)
        scale = vt[row:row + 1, :] * jax.lax.rsqrt(var + BN_EPS)   # gamma / sqrt(var+eps)
        return jnp.maximum(d * scale + vt[row + 1:row + 2, :], 0.0)

    # Fused speaker+emotion encoder (spk hidden lanes 0:32, emo hidden lanes 32:64).
    h = jnp.dot(x, w_ref[0][:INPUT_DIM, :], preferred_element_type=jnp.float32)
    h = bn_relu(h, 0)
    h = jnp.dot(h[:, :K_DIM], w_ref[1], preferred_element_type=jnp.float32)
    h = bn_relu(h, 2)
    # Block-diagonal fc_out + composed emotion projection:
    #   lanes 0:32  = cat(spk_latent, emo_latent)
    #   lanes 32:36 = logits_enc  (emotion_projection folded in host-side)
    lat = jnp.dot(h[:, :K_DIM], w_ref[2], preferred_element_type=jnp.float32) + vt[4:5, :]

    # Fused auxiliary classifier + decoder MLP (aux lanes 0:32, dec lanes 32:64).
    # W[3] rows 32:64 are zero, so the extra logits_enc lanes in `lat` are inert here.
    h = jnp.dot(lat[:, :K_DIM], w_ref[3], preferred_element_type=jnp.float32)
    h = bn_relu(h, 5)
    h = jnp.dot(h[:, :K_DIM], w_ref[4], preferred_element_type=jnp.float32)
    h = bn_relu(h, 7)

    # Final fc: reconst lanes 0:32, aux logits lanes 36:39.
    out = jnp.dot(h[:, :K_DIM], w_ref[5], preferred_element_type=jnp.float32) + vt[9:10, :]
    # Merge logits_enc (already sitting in lanes 32:36 of `lat`) with a lane-
    # masked add instead of a 7th matmul.
    lane = jax.lax.broadcasted_iota(jnp.int32, out.shape, 1)
    enc_mask = (lane >= ENC_LO) & (lane < ENC_HI)
    out = out + jnp.where(enc_mask, lat, 0.0)

    out_ref[...] = out.astype(out_ref.dtype)


# ----------------------------------------------------------------------------
# Wrapper (jit'd so the output slices fuse with the kernel's consumers)
# ----------------------------------------------------------------------------
@jax.jit
def emotion_component_separator(x, w_stack, vec_table):
    # TODO(synk): if this forward is evaluated over many independent batches,
    # add a 1-D "parallel" grid over batch tiles with weight index_maps pinned
    # to block 0 (VMEM-resident weights).  Only valid across *independent*
    # batches: training-mode BN statistics couple all rows of one batch.
    b = x.shape[0]
    flops = 2 * b * LANES * (INPUT_DIM + (N_MATS - 1) * K_DIM)
    bytes_accessed = (w_stack.size + vec_table.size + b * INPUT_DIM + b * LANES) * 4
    vmem = pl.BlockSpec(memory_space=pltpu.MemorySpace.VMEM)
    out = pl.pallas_call(
        separator_kernel,
        out_shape=jax.ShapeDtypeStruct((b, LANES), jnp.float32),
        in_specs=[vmem, vmem, vmem],
        out_specs=vmem,
        cost_estimate=pl.CostEstimate(
            flops=flops, transcendentals=4 * LANES, bytes_accessed=bytes_accessed),
    )(x.astype(jnp.float32), w_stack, vec_table)
    reconst = out[:, RECONST_LO:RECONST_HI]
    logits_enc = out[:, ENC_LO:ENC_HI]
    logits_aux = out[:, AUX_LO:AUX_HI]
    return reconst, logits_enc, logits_aux


# ----------------------------------------------------------------------------
# Deterministic parameter construction (PyTorch-like per-module layout)
# ----------------------------------------------------------------------------
def _init_mlp(key, in_dim, hid_dim, n_layers, out_dim):
    """Flat list: n_layers * [W, b, gamma, beta] + [W_out, b_out] (W is (in,out))."""
    params = []
    d = in_dim
    for _ in range(n_layers):
        key, k1, k2, k3, k4 = jax.random.split(key, 5)
        params += [
            jax.random.normal(k1, (d, hid_dim), jnp.float32) * 0.1,          # W
            jax.random.normal(k2, (1, hid_dim), jnp.float32) * 0.1,          # b
            1.0 + 0.1 * jax.random.normal(k3, (1, hid_dim), jnp.float32),    # gamma
            0.1 * jax.random.normal(k4, (1, hid_dim), jnp.float32),          # beta
        ]
        d = hid_dim
    key, k1, k2 = jax.random.split(key, 3)
    params += [
        jax.random.normal(k1, (d, out_dim), jnp.float32) * 0.1,
        jax.random.normal(k2, (1, out_dim), jnp.float32) * 0.1,
    ]
    return params, key


def _mlp_split(p, n_layers):
    layers = [p[4 * l:4 * l + 4] for l in range(n_layers)]
    fc = p[4 * n_layers:4 * n_layers + 2]
    return layers, fc


def pack_params(spk_p, emo_p, proj_p, aux_p, dec_p):
    """Pack all module parameters into a (6,64,128) weight slab + (10,128) vec table."""
    A = np.asarray
    spk_l, spk_fc = _mlp_split(spk_p, SPK_NL)
    emo_l, emo_fc = _mlp_split(emo_p, EMO_NL)
    aux_l, aux_fc = _mlp_split(aux_p, AUX_NL)
    dec_l, dec_fc = _mlp_split(dec_p, DEC_NL)

    W = np.zeros((N_MATS, K_DIM, LANES), np.float32)
    V = np.zeros((N_VEC_ROWS, LANES), np.float32)

    # --- fused encoder (spk hidden lanes 0:32, emo hidden lanes 32:64) ---
    W[0, :INPUT_DIM, 0:SPK_HID] = A(spk_l[0][0])
    W[0, :INPUT_DIM, SPK_HID:SPK_HID + EMO_HID] = A(emo_l[0][0])
    W[1, 0:SPK_HID, 0:SPK_HID] = A(spk_l[1][0])
    W[1, SPK_HID:SPK_HID + EMO_HID, SPK_HID:SPK_HID + EMO_HID] = A(emo_l[1][0])
    for l, (row_g, row_b) in enumerate([(0, 1), (2, 3)]):       # gamma / beta rows
        V[row_g, 0:SPK_HID] = A(spk_l[l][2])[0]
        V[row_g, SPK_HID:SPK_HID + EMO_HID] = A(emo_l[l][2])[0]
        V[row_b, 0:SPK_HID] = A(spk_l[l][3])[0]
        V[row_b, SPK_HID:SPK_HID + EMO_HID] = A(emo_l[l][3])[0]

    # --- block-diagonal fc_out + folded emotion projection ---
    # lanes 0:32 -> cat(spk_latent, emo_latent); lanes 32:36 -> logits_enc
    W[2, 0:SPK_HID, 0:SPK_LAT] = A(spk_fc[0])
    W[2, SPK_HID:SPK_HID + EMO_HID, SPK_LAT:LAT_DIM] = A(emo_fc[0])
    W[2, SPK_HID:SPK_HID + EMO_HID, ENC_LO:ENC_HI] = A(emo_fc[0]) @ A(proj_p[0])
    V[4, 0:SPK_LAT] = A(spk_fc[1])[0]
    V[4, SPK_LAT:LAT_DIM] = A(emo_fc[1])[0]
    V[4, ENC_LO:ENC_HI] = (A(emo_fc[1]) @ A(proj_p[0]) + A(proj_p[1]))[0]

    # --- fused aux classifier + decoder (aux lanes 0:32, dec lanes 32:64) ---
    W[3, 0:SPK_LAT, 0:AUX_HID] = A(aux_l[0][0])                       # aux <- spk latent
    W[3, 0:LAT_DIM, AUX_HID:AUX_HID + DEC_HID] = A(dec_l[0][0])       # dec <- full latent
    W[4, 0:AUX_HID, 0:AUX_HID] = A(aux_l[1][0])
    W[4, AUX_HID:AUX_HID + DEC_HID, AUX_HID:AUX_HID + DEC_HID] = A(dec_l[1][0])
    for l, (row_g, row_b) in enumerate([(5, 6), (7, 8)]):
        V[row_g, 0:AUX_HID] = A(aux_l[l][2])[0]
        V[row_g, AUX_HID:AUX_HID + DEC_HID] = A(dec_l[l][2])[0]
        V[row_b, 0:AUX_HID] = A(aux_l[l][3])[0]
        V[row_b, AUX_HID:AUX_HID + DEC_HID] = A(dec_l[l][3])[0]

    # --- final fc: reconst lanes 0:32, aux logits lanes 36:39 ---
    W[5, AUX_HID:AUX_HID + DEC_HID, RECONST_LO:RECONST_HI] = A(dec_fc[0])
    W[5, 0:AUX_HID, AUX_LO:AUX_HI] = A(aux_fc[0])
    V[9, RECONST_LO:RECONST_HI] = A(dec_fc[1])[0]
    V[9, AUX_LO:AUX_HI] = A(aux_fc[1])[0]

    return jnp.asarray(W), jnp.asarray(V)


# ----------------------------------------------------------------------------
# Pure-JAX reference (faithful, un-fused PyTorch forward semantics)
# ----------------------------------------------------------------------------
def _ref_mlp(x, layers):
    for w, b, g, bt in layers:
        h = x @ w + b
        mu = jnp.mean(h, axis=0, keepdims=True)
        var = jnp.mean((h - mu) ** 2, axis=0, keepdims=True)   # biased variance
        h = g * (h - mu) / jnp.sqrt(var + BN_EPS) + bt
        x = jnp.maximum(h, 0.0)
    return x


def _ref_forward(x, spk_p, emo_p, proj_p, aux_p, dec_p):
    spk_l, spk_fc = _mlp_split(spk_p, SPK_NL)
    emo_l, emo_fc = _mlp_split(emo_p, EMO_NL)
    aux_l, aux_fc = _mlp_split(aux_p, AUX_NL)
    dec_l, dec_fc = _mlp_split(dec_p, DEC_NL)

    spk_latent = _ref_mlp(x, spk_l) @ spk_fc[0] + spk_fc[1]
    emo_latent = _ref_mlp(x, emo_l) @ emo_fc[0] + emo_fc[1]
    logits_enc = emo_latent @ proj_p[0] + proj_p[1]
    logits_aux = _ref_mlp(spk_latent, aux_l) @ aux_fc[0] + aux_fc[1]
    latent = jnp.concatenate([spk_latent, emo_latent], axis=1)
    reconst = _ref_mlp(latent, dec_l) @ dec_fc[0] + dec_fc[1]
    return reconst, logits_enc, logits_aux


# ----------------------------------------------------------------------------
if __name__ == "__main__":
    key = jax.random.PRNGKey(0)
    key, kx = jax.random.split(key)
    x = jax.random.normal(kx, (BATCH, INPUT_DIM), jnp.float32)

    spk_p, key = _init_mlp(key, INPUT_DIM, SPK_HID, SPK_NL, SPK_LAT)
    emo_p, key = _init_mlp(key, INPUT_DIM, EMO_HID, EMO_NL, EMO_LAT)
    key, k1, k2 = jax.random.split(key, 3)
    proj_p = [jax.random.normal(k1, (EMO_LAT, N_EMOTIONS), jnp.float32) * 0.1,
              jax.random.normal(k2, (1, N_EMOTIONS), jnp.float32) * 0.1]
    aux_p, key = _init_mlp(key, SPK_LAT, AUX_HID, AUX_NL, AUX_NCLS)
    dec_p, key = _init_mlp(key, LAT_DIM, DEC_HID, DEC_NL, INPUT_DIM)

    w_stack, vec_table = pack_params(spk_p, emo_p, proj_p, aux_p, dec_p)

    reconst, logits_enc, logits_aux = jax.block_until_ready(
        emotion_component_separator(x, w_stack, vec_table))

    ref_r, ref_e, ref_a = _ref_forward(x, spk_p, emo_p, proj_p, aux_p, dec_p)
    np.testing.assert_allclose(np.asarray(reconst), np.asarray(ref_r), rtol=1e-4, atol=1e-4)
    np.testing.assert_allclose(np.asarray(logits_enc), np.asarray(ref_e), rtol=1e-4, atol=1e-4)
    np.testing.assert_allclose(np.asarray(logits_aux), np.asarray(ref_a), rtol=1e-4, atol=1e-4)

    assert reconst.shape == (BATCH, INPUT_DIM)
    assert logits_enc.shape == (BATCH, N_EMOTIONS)
    assert logits_aux.shape == (BATCH, AUX_NCLS)
    print("KERNEL_OK")
</pallas_src>

<mosaic_0001>
module attributes {stable_mosaic.version = 11 : i64} {
  func.func @separator_kernel(%arg0: memref<8x32xf32, #tpu.memory_space<vmem>>, %arg1: memref<6x64x128xf32, #tpu.memory_space<vmem>>, %arg2: memref<10x128xf32, #tpu.memory_space<vmem>>, %arg3: memref<8x128xf32, #tpu.memory_space<vmem>>) attributes {dimension_semantics = [], scalar_prefetch = 0 : i64, scratch_operands = 0 : i64, tpu.core_type = #tpu.core_type<tc>} {
    %c0 = arith.constant 0 : index
    %c0_0 = arith.constant 0 : index
    %0 = vector.load %arg0[%c0, %c0_0] : memref<8x32xf32, #tpu.memory_space<vmem>>, vector<8x32xf32>
    %c0_1 = arith.constant 0 : index
    %c0_2 = arith.constant 0 : index
    %1 = vector.load %arg2[%c0_1, %c0_2] : memref<10x128xf32, #tpu.memory_space<vmem>>, vector<10x128xf32>
    %c0_3 = arith.constant 0 : index
    %c0_4 = arith.constant 0 : index
    %c0_5 = arith.constant 0 : index
    %2 = vector.load %arg1[%c0_3, %c0_4, %c0_5] : memref<6x64x128xf32, #tpu.memory_space<vmem>>, vector<1x64x128xf32>
    %3 = vector.shape_cast %2 : vector<1x64x128xf32> to vector<64x128xf32>
    %4 = vector.extract_strided_slice %3 {offsets = [0, 0], sizes = [32, 128], strides = [1, 1]} : vector<64x128xf32> to vector<32x128xf32>
    %cst = arith.constant dense<0.000000e+00> : vector<8x128xf32>
    %5 = tpu.matmul %0, %4, %cst {dimension_numbers = #tpu.dot_dimension_numbers<[1], [0], [0], [1], [0, 0, 1, 1], [], []>} : vector<8x32xf32>, vector<32x128xf32>, vector<8x128xf32> -> vector<8x128xf32>
    %cst_6 = arith.constant dense<0.000000e+00> : vector<128xf32>
    %6 = vector.multi_reduction <add>, %5, %cst_6 [0] : vector<8x128xf32> to vector<128xf32>
    %7 = vector.shape_cast %6 : vector<128xf32> to vector<1x128xf32>
    %cst_7 = arith.constant 8.000000e+00 : f32
    %8 = vector.broadcast %cst_7 : f32 to vector<1x128xf32>
    %9 = arith.divf %7, %8 : vector<1x128xf32>
    %10 = vector.broadcast %9 : vector<1x128xf32> to vector<8x128xf32>
    %11 = arith.subf %5, %10 : vector<8x128xf32>
    %12 = arith.mulf %11, %11 : vector<8x128xf32>
    %cst_8 = arith.constant dense<0.000000e+00> : vector<128xf32>
    %13 = vector.multi_reduction <add>, %12, %cst_8 [0] : vector<8x128xf32> to vector<128xf32>
    %14 = vector.shape_cast %13 : vector<128xf32> to vector<1x128xf32>
    %cst_9 = arith.constant 8.000000e+00 : f32
    %15 = vector.broadcast %cst_9 : f32 to vector<1x128xf32>
    %16 = arith.divf %14, %15 : vector<1x128xf32>
    %17 = vector.extract_strided_slice %1 {offsets = [0, 0], sizes = [1, 128], strides = [1, 1]} : vector<10x128xf32> to vector<1x128xf32>
    %cst_10 = arith.constant 9.99999974E-6 : f32
    %18 = vector.broadcast %cst_10 : f32 to vector<1x128xf32>
    %19 = arith.addf %16, %18 : vector<1x128xf32>
    %20 = math.rsqrt %19 : vector<1x128xf32>
    %21 = arith.mulf %17, %20 : vector<1x128xf32>
    %22 = vector.broadcast %21 : vector<1x128xf32> to vector<8x128xf32>
    %23 = arith.mulf %11, %22 : vector<8x128xf32>
    %24 = vector.extract_strided_slice %1 {offsets = [1, 0], sizes = [1, 128], strides = [1, 1]} : vector<10x128xf32> to vector<1x128xf32>
    %25 = vector.broadcast %24 : vector<1x128xf32> to vector<8x128xf32>
    %26 = arith.addf %23, %25 : vector<8x128xf32>
    %cst_11 = arith.constant 0.000000e+00 : f32
    %27 = vector.broadcast %cst_11 : f32 to vector<8x128xf32>
    %28 = arith.maximumf %26, %27 : vector<8x128xf32>
    %29 = vector.extract_strided_slice %28 {offsets = [0, 0], sizes = [8, 64], strides = [1, 1]} : vector<8x128xf32> to vector<8x64xf32>
    %c1 = arith.constant 1 : index
    %c0_12 = arith.constant 0 : index
    %c0_13 = arith.constant 0 : index
    %30 = vector.load %arg1[%c1, %c0_12, %c0_13] : memref<6x64x128xf32, #tpu.memory_space<vmem>>, vector<1x64x128xf32>
    %31 = vector.shape_cast %30 : vector<1x64x128xf32> to vector<64x128xf32>
    %cst_14 = arith.constant dense<0.000000e+00> : vector<8x128xf32>
    %32 = tpu.matmul %29, %31, %cst_14 {dimension_numbers = #tpu.dot_dimension_numbers<[1], [0], [0], [1], [0, 0, 1, 1], [], []>} : vector<8x64xf32>, vector<64x128xf32>, vector<8x128xf32> -> vector<8x128xf32>
    %cst_15 = arith.constant dense<0.000000e+00> : vector<128xf32>
    %33 = vector.multi_reduction <add>, %32, %cst_15 [0] : vector<8x128xf32> to vector<128xf32>
    %34 = vector.shape_cast %33 : vector<128xf32> to vector<1x128xf32>
    %cst_16 = arith.constant 8.000000e+00 : f32
    %35 = vector.broadcast %cst_16 : f32 to vector<1x128xf32>
    %36 = arith.divf %34, %35 : vector<1x128xf32>
    %37 = vector.broadcast %36 : vector<1x128xf32> to vector<8x128xf32>
    %38 = arith.subf %32, %37 : vector<8x128xf32>
    %39 = arith.mulf %38, %38 : vector<8x128xf32>
    %cst_17 = arith.constant dense<0.000000e+00> : vector<128xf32>
    %40 = vector.multi_reduction <add>, %39, %cst_17 [0] : vector<8x128xf32> to vector<128xf32>
    %41 = vector.shape_cast %40 : vector<128xf32> to vector<1x128xf32>
    %cst_18 = arith.constant 8.000000e+00 : f32
    %42 = vector.broadcast %cst_18 : f32 to vector<1x128xf32>
    %43 = arith.divf %41, %42 : vector<1x128xf32>
    %44 = vector.extract_strided_slice %1 {offsets = [2, 0], sizes = [1, 128], strides = [1, 1]} : vector<10x128xf32> to vector<1x128xf32>
    %cst_19 = arith.constant 9.99999974E-6 : f32
    %45 = vector.broadcast %cst_19 : f32 to vector<1x128xf32>
    %46 = arith.addf %43, %45 : vector<1x128xf32>
    %47 = math.rsqrt %46 : vector<1x128xf32>
    %48 = arith.mulf %44, %47 : vector<1x128xf32>
    %49 = vector.broadcast %48 : vector<1x128xf32> to vector<8x128xf32>
    %50 = arith.mulf %38, %49 : vector<8x128xf32>
    %51 = vector.extract_strided_slice %1 {offsets = [3, 0], sizes = [1, 128], strides = [1, 1]} : vector<10x128xf32> to vector<1x128xf32>
    %52 = vector.broadcast %51 : vector<1x128xf32> to vector<8x128xf32>
    %53 = arith.addf %50, %52 : vector<8x128xf32>
    %cst_20 = arith.constant 0.000000e+00 : f32
    %54 = vector.broadcast %cst_20 : f32 to vector<8x128xf32>
    %55 = arith.maximumf %53, %54 : vector<8x128xf32>
    %56 = vector.extract_strided_slice %55 {offsets = [0, 0], sizes = [8, 64], strides = [1, 1]} : vector<8x128xf32> to vector<8x64xf32>
    %c2 = arith.constant 2 : index
    %c0_21 = arith.constant 0 : index
    %c0_22 = arith.constant 0 : index
    %57 = vector.load %arg1[%c2, %c0_21, %c0_22] : memref<6x64x128xf32, #tpu.memory_space<vmem>>, vector<1x64x128xf32>
    %58 = vector.shape_cast %57 : vector<1x64x128xf32> to vector<64x128xf32>
    %cst_23 = arith.constant dense<0.000000e+00> : vector<8x128xf32>
    %59 = tpu.matmul %56, %58, %cst_23 {dimension_numbers = #tpu.dot_dimension_numbers<[1], [0], [0], [1], [0, 0, 1, 1], [], []>} : vector<8x64xf32>, vector<64x128xf32>, vector<8x128xf32> -> vector<8x128xf32>
    %60 = vector.extract_strided_slice %1 {offsets = [4, 0], sizes = [1, 128], strides = [1, 1]} : vector<10x128xf32> to vector<1x128xf32>
    %61 = vector.broadcast %60 : vector<1x128xf32> to vector<8x128xf32>
    %62 = arith.addf %59, %61 : vector<8x128xf32>
    %63 = vector.extract_strided_slice %62 {offsets = [0, 0], sizes = [8, 64], strides = [1, 1]} : vector<8x128xf32> to vector<8x64xf32>
    %c3 = arith.constant 3 : index
    %c0_24 = arith.constant 0 : index
    %c0_25 = arith.constant 0 : index
    %64 = vector.load %arg1[%c3, %c0_24, %c0_25] : memref<6x64x128xf32, #tpu.memory_space<vmem>>, vector<1x64x128xf32>
    %65 = vector.shape_cast %64 : vector<1x64x128xf32> to vector<64x128xf32>
    %cst_26 = arith.constant dense<0.000000e+00> : vector<8x128xf32>
    %66 = tpu.matmul %63, %65, %cst_26 {dimension_numbers = #tpu.dot_dimension_numbers<[1], [0], [0], [1], [0, 0, 1, 1], [], []>} : vector<8x64xf32>, vector<64x128xf32>, vector<8x128xf32> -> vector<8x128xf32>
    %cst_27 = arith.constant dense<0.000000e+00> : vector<128xf32>
    %67 = vector.multi_reduction <add>, %66, %cst_27 [0] : vector<8x128xf32> to vector<128xf32>
    %68 = vector.shape_cast %67 : vector<128xf32> to vector<1x128xf32>
    %cst_28 = arith.constant 8.000000e+00 : f32
    %69 = vector.broadcast %cst_28 : f32 to vector<1x128xf32>
    %70 = arith.divf %68, %69 : vector<1x128xf32>
    %71 = vector.broadcast %70 : vector<1x128xf32> to vector<8x128xf32>
    %72 = arith.subf %66, %71 : vector<8x128xf32>
    %73 = arith.mulf %72, %72 : vector<8x128xf32>
    %cst_29 = arith.constant dense<0.000000e+00> : vector<128xf32>
    %74 = vector.multi_reduction <add>, %73, %cst_29 [0] : vector<8x128xf32> to vector<128xf32>
    %75 = vector.shape_cast %74 : vector<128xf32> to vector<1x128xf32>
    %cst_30 = arith.constant 8.000000e+00 : f32
    %76 = vector.broadcast %cst_30 : f32 to vector<1x128xf32>
    %77 = arith.divf %75, %76 : vector<1x128xf32>
    %78 = vector.extract_strided_slice %1 {offsets = [5, 0], sizes = [1, 128], strides = [1, 1]} : vector<10x128xf32> to vector<1x128xf32>
    %cst_31 = arith.constant 9.99999974E-6 : f32
    %79 = vector.broadcast %cst_31 : f32 to vector<1x128xf32>
    %80 = arith.addf %77, %79 : vector<1x128xf32>
    %81 = math.rsqrt %80 : vector<1x128xf32>
    %82 = arith.mulf %78, %81 : vector<1x128xf32>
    %83 = vector.broadcast %82 : vector<1x128xf32> to vector<8x128xf32>
    %84 = arith.mulf %72, %83 : vector<8x128xf32>
    %85 = vector.extract_strided_slice %1 {offsets = [6, 0], sizes = [1, 128], strides = [1, 1]} : vector<10x128xf32> to vector<1x128xf32>
    %86 = vector.broadcast %85 : vector<1x128xf32> to vector<8x128xf32>
    %87 = arith.addf %84, %86 : vector<8x128xf32>
    %cst_32 = arith.constant 0.000000e+00 : f32
    %88 = vector.broadcast %cst_32 : f32 to vector<8x128xf32>
    %89 = arith.maximumf %87, %88 : vector<8x128xf32>
    %90 = vector.extract_strided_slice %89 {offsets = [0, 0], sizes = [8, 64], strides = [1, 1]} : vector<8x128xf32> to vector<8x64xf32>
    %c4 = arith.constant 4 : index
    %c0_33 = arith.constant 0 : index
    %c0_34 = arith.constant 0 : index
    %91 = vector.load %arg1[%c4, %c0_33, %c0_34] : memref<6x64x128xf32, #tpu.memory_space<vmem>>, vector<1x64x128xf32>
    %92 = vector.shape_cast %91 : vector<1x64x128xf32> to vector<64x128xf32>
    %cst_35 = arith.constant dense<0.000000e+00> : vector<8x128xf32>
    %93 = tpu.matmul %90, %92, %cst_35 {dimension_numbers = #tpu.dot_dimension_numbers<[1], [0], [0], [1], [0, 0, 1, 1], [], []>} : vector<8x64xf32>, vector<64x128xf32>, vector<8x128xf32> -> vector<8x128xf32>
    %cst_36 = arith.constant dense<0.000000e+00> : vector<128xf32>
    %94 = vector.multi_reduction <add>, %93, %cst_36 [0] : vector<8x128xf32> to vector<128xf32>
    %95 = vector.shape_cast %94 : vector<128xf32> to vector<1x128xf32>
    %cst_37 = arith.constant 8.000000e+00 : f32
    %96 = vector.broadcast %cst_37 : f32 to vector<1x128xf32>
    %97 = arith.divf %95, %96 : vector<1x128xf32>
    %98 = vector.broadcast %97 : vector<1x128xf32> to vector<8x128xf32>
    %99 = arith.subf %93, %98 : vector<8x128xf32>
    %100 = arith.mulf %99, %99 : vector<8x128xf32>
    %cst_38 = arith.constant dense<0.000000e+00> : vector<128xf32>
    %101 = vector.multi_reduction <add>, %100, %cst_38 [0] : vector<8x128xf32> to vector<128xf32>
    %102 = vector.shape_cast %101 : vector<128xf32> to vector<1x128xf32>
    %cst_39 = arith.constant 8.000000e+00 : f32
    %103 = vector.broadcast %cst_39 : f32 to vector<1x128xf32>
    %104 = arith.divf %102, %103 : vector<1x128xf32>
    %105 = vector.extract_strided_slice %1 {offsets = [7, 0], sizes = [1, 128], strides = [1, 1]} : vector<10x128xf32> to vector<1x128xf32>
    %cst_40 = arith.constant 9.99999974E-6 : f32
    %106 = vector.broadcast %cst_40 : f32 to vector<1x128xf32>
    %107 = arith.addf %104, %106 : vector<1x128xf32>
    %108 = math.rsqrt %107 : vector<1x128xf32>
    %109 = arith.mulf %105, %108 : vector<1x128xf32>
    %110 = vector.broadcast %109 : vector<1x128xf32> to vector<8x128xf32>
    %111 = arith.mulf %99, %110 : vector<8x128xf32>
    %112 = vector.extract_strided_slice %1 {offsets = [8, 0], sizes = [1, 128], strides = [1, 1]} : vector<10x128xf32> to vector<1x128xf32>
    %113 = vector.broadcast %112 : vector<1x128xf32> to vector<8x128xf32>
    %114 = arith.addf %111, %113 : vector<8x128xf32>
    %cst_41 = arith.constant 0.000000e+00 : f32
    %115 = vector.broadcast %cst_41 : f32 to vector<8x128xf32>
    %116 = arith.maximumf %114, %115 : vector<8x128xf32>
    %117 = vector.extract_strided_slice %116 {offsets = [0, 0], sizes = [8, 64], strides = [1, 1]} : vector<8x128xf32> to vector<8x64xf32>
    %c5 = arith.constant 5 : index
    %c0_42 = arith.constant 0 : index
    %c0_43 = arith.constant 0 : index
    %118 = vector.load %arg1[%c5, %c0_42, %c0_43] : memref<6x64x128xf32, #tpu.memory_space<vmem>>, vector<1x64x128xf32>
    %119 = vector.shape_cast %118 : vector<1x64x128xf32> to vector<64x128xf32>
    %cst_44 = arith.constant dense<0.000000e+00> : vector<8x128xf32>
    %120 = tpu.matmul %117, %119, %cst_44 {dimension_numbers = #tpu.dot_dimension_numbers<[1], [0], [0], [1], [0, 0, 1, 1], [], []>} : vector<8x64xf32>, vector<64x128xf32>, vector<8x128xf32> -> vector<8x128xf32>
    %121 = vector.extract_strided_slice %1 {offsets = [9, 0], sizes = [1, 128], strides = [1, 1]} : vector<10x128xf32> to vector<1x128xf32>
    %122 = vector.broadcast %121 : vector<1x128xf32> to vector<8x128xf32>
    %123 = arith.addf %120, %122 : vector<8x128xf32>
    %124 = tpu.iota {dimensions = array<i32: 1>} : vector<8x128xi32>
    %c32_i32 = arith.constant 32 : i32
    %125 = vector.broadcast %c32_i32 : i32 to vector<8x128xi32>
    %126 = arith.cmpi sge, %124, %125 : vector<8x128xi32>
    %c36_i32 = arith.constant 36 : i32
    %127 = vector.broadcast %c36_i32 : i32 to vector<8x128xi32>
    %128 = arith.cmpi slt, %124, %127 : vector<8x128xi32>
    %129 = arith.andi %126, %128 : vector<8x128xi1>
    %cst_45 = arith.constant 0.000000e+00 : f32
    %130 = vector.broadcast %cst_45 : f32 to vector<8x128xf32>
    %131 = arith.select %129, %62, %130 : vector<8x128xi1>, vector<8x128xf32>
    %132 = arith.addf %123, %131 : vector<8x128xf32>
    %c0_46 = arith.constant 0 : index
    %c0_47 = arith.constant 0 : index
    %133 = vector.load %arg3[%c0_46, %c0_47] : memref<8x128xf32, #tpu.memory_space<vmem>>, vector<8x128xf32>
    tpu.vector_store %arg3[%c0_46, %c0_47], %132 {strides = array<i32>} : memref<8x128xf32, #tpu.memory_space<vmem>>, vector<8x128xf32>,
    return
  }
}

</mosaic_0001>

<llo_original>
// kernel: emotion_component_separator.1
$region0: #{emotion_component_separator.1}
  #allocation0 [shape = 'u32[]', space=smem, size = 0x4, offset = 0x4, fixed_abs, tag = 'smem constant byte address 0x4 - core index']
  #allocation1 [shape = 'u32[72,128]{1,0:T(1,128)}', space=vmem, size = 0x9000, scoped, tag = 'internal scratch']
  %s0 = inlined_call_operand.hbm [shape: f32[8,32], index: 0, kind: input, shape index: {}]
  %s1 = inlined_call_operand.hbm [shape: f32[6,64,128], index: 1, kind: input, shape index: {}]
  %s2 = inlined_call_operand.hbm [shape: f32[10,128], index: 2, kind: input, shape index: {}]
  %s3 = inlined_call_operand.vmem [shape: f32[8,128], index: 3, kind: output, shape index: {}]
  %s4 = sld [smem:[#allocation0]]
  $region34: #{emotion_component_separator.1} parent=0
    _
  %s6 = ssub.s32 1, %s4
  %s7 = scalar_select 0, %s6, %s4
  $region1: #{emotion_component_separator.1} parent=0
    #allocation2 [shape = 'u8[4096]{0}', space=vmem, size = 0x1000, scoped, tag = 'input window, operand 0, single buffered']
    #allocation3 [shape = 's32[1]{0}', space=sflag, size = 0x4, scoped, tag = 'scoped memory for emotion_component_separator.1']
    #allocation4 [shape = 'u8[196608]{0}', space=vmem, size = 0x30000, scoped, tag = 'input window, operand 1, single buffered']
    #allocation5 [shape = 's32[1]{0}', space=sflag, size = 0x4, scoped, tag = 'scoped memory for emotion_component_separator.1']
    #allocation6 [shape = 'u8[8192]{0}', space=vmem, size = 0x2000, scoped, tag = 'input window, operand 2, single buffered']
    %8 = vsyncpa [#allocation3], 0
    %9 = vsyncpa [#allocation5], 0
    // Predicated region
    $region2: #{emotion_component_separator.1} parent=1 // pred_check
      _
    $region3: #{emotion_component_separator.1} parent=1 // pred_check_branch
      %11 = sbr.rel (0) target = $region5
    $region4: #{emotion_component_separator.1} parent=1 // pred_region
      %13 = vsyncadd [#allocation3], 0
      %s15 = sshll.u32 %s0, 4
      %s16 = int_to_ptr.hbm [resolvable:$true] %s15
      %s17 = sshll.u32 [#allocation2], 4
      %s18 = int_to_ptr.vmem [resolvable:$true] %s17
      %20 = dma.hbm_to_vmem [thread:$0]  %s16, 128, %s18, [#allocation3]
    $region5: #{emotion_component_separator.1} parent=1 // pred_fallthru
      _
    // Predicated region
    $region6: #{emotion_component_separator.1} parent=1 // pred_check
      _
    $region7: #{emotion_component_separator.1} parent=1 // pred_check_branch
      %22 = sbr.rel (0) target = $region9
    $region8: #{emotion_component_separator.1} parent=1 // pred_region
      %24 = vsyncadd [#allocation5], 0
      %s25 = sshll.u32 %s1, 4
      %s26 = int_to_ptr.hbm [resolvable:$true] %s25
      %s27 = sshll.u32 [#allocation4], 4
      %s28 = int_to_ptr.vmem [resolvable:$true] %s27
      %33 = dma.hbm_to_vmem [thread:$0]  %s26, 6144, %s28, [#allocation5], 128, 128, 8
    $region9: #{emotion_component_separator.1} parent=1 // pred_fallthru
      _
    // Predicated region
    $region10: #{emotion_component_separator.1} parent=1 // pred_check
      _
    $region11: #{emotion_component_separator.1} parent=1 // pred_check_branch
      %35 = sbr.rel (0) target = $region13
    $region12: #{emotion_component_separator.1} parent=1 // pred_region
      %37 = vsyncadd [#allocation5], 0
      %s38 = sshll.u32 %s2, 4
      %s39 = int_to_ptr.hbm [resolvable:$true] %s38
      %s40 = sshll.u32 [#allocation6], 4
      %s41 = int_to_ptr.vmem [resolvable:$true] %s40
      %46 = dma.hbm_to_vmem [thread:$0]  %s39, 256, %s41, [#allocation5], 128, 128, 8
    $region13: #{emotion_component_separator.1} parent=1 // pred_fallthru
      _
    // Predicated region
    $region14: #{emotion_component_separator.1} parent=1 // pred_check
      _
    $region15: #{emotion_component_separator.1} parent=1 // pred_check_branch
      %48 = sbr.rel (0) target = $region17
    $region16: #{emotion_component_separator.1} parent=1 // pred_region
      %50 = dma.done [#allocation3], 128
    $region17: #{emotion_component_separator.1} parent=1 // pred_fallthru
      _
    // Predicated region
    $region18: #{emotion_component_separator.1} parent=1 // pred_check
      _
    $region19: #{emotion_component_separator.1} parent=1 // pred_check_branch
      %52 = sbr.rel (0) target = $region21
    $region20: #{emotion_component_separator.1} parent=1 // pred_region
      %54 = dma.done [#allocation5], 6144
    $region21: #{emotion_component_separator.1} parent=1 // pred_fallthru
      _
    // Predicated region
    $region22: #{emotion_component_separator.1} parent=1 // pred_check
      _
    $region23: #{emotion_component_separator.1} parent=1 // pred_check_branch
      %56 = sbr.rel (0) target = $region25
    $region24: #{emotion_component_separator.1} parent=1 // pred_region
      %58 = dma.done [#allocation5], 256
    $region25: #{emotion_component_separator.1} parent=1 // pred_fallthru
      _
    %v59 = vld [vmem:[#allocation2] sm:$0xff]
    %v60 = vld [vmem:[#allocation6] sm:$0xff]
    %v61 = vld [vmem:[#allocation6 + $0x8] sm:$0x3]
    %v62 = vld [vmem:[#allocation4] sm:$0xff]
    %v63 = vld [vmem:[#allocation4 + $0x8] sm:$0xff]
    %v64 = vld [vmem:[#allocation4 + $0x10] sm:$0xff]
    %v65 = vld [vmem:[#allocation4 + $0x18] sm:$0xff]
    %vm66 = vcmask 261120
    %v68 = vsel %vm66, %v59, 0
    %70 = vmatpush.msra.mxu0 0.0
    %71 = vmatpush.msra.mxu0 0.0
    %72 = vmatpush.msra.mxu0 0.0
    %73 = vmatpush.msra.mxu0 0.0
    %74 = vmatpush.msra.mxu0 0.0
    %75 = vmatpush.msra.mxu0 0.0
    %76 = vmatpush.msra.mxu0 0.0
    %77 = vmatpush.msra.mxu0 0.0
    %78 = vmatpush.msra.mxu0 0.0
    %79 = vmatpush.msra.mxu0 0.0
    %80 = vmatpush.msra.mxu0 0.0
    %81 = vmatpush.msra.mxu0 0.0
    %82 = vmatpush.msra.mxu0 %v65
    %83 = vmatpush.msra.mxu0 %v64
    %84 = vmatpush.msra.mxu0 %v63
    %85 = vmatpush.msra.mxu0 %v62
    %86 = vmatmul.f32.gmra.mxu0 %v68
    %v87 = vpop.f32.mrf.mxu0
    %v88 = vadd.f32 0.0, %v87
    %89 = vdwg.mxu0
    %v90 = vrot.slane %v88, 4
    %v91 = vadd.f32 %v88, %v90
    %v92 = vrot.slane %v91, 2
    %v93 = vadd.f32 %v91, %v92
    %v94 = vrot.slane %v93, 1
    %v95 = vadd.f32 %v93, %v94
    %v96 = vrcp.pop 8.0
    %v97 = vmul.f32 8.0, %v96
    %v98 = vsub.f32 1.0, %v97
    %v99 = vmul.f32 %v96, %v98
    %v100 = vadd.f32 %v96, %v99
    %vm101 = vweird.f32 %v96
    %v102 = vsel %vm101, %v96, %v100
    %v103 = vmul.f32 %v95, %v102
    %v104 = vsub.f32 %v88, %v103
    %v105 = vmul.f32 %v104, %v104
    %v106 = vrot.slane %v105, 4
    %v107 = vadd.f32 %v105, %v106
    %v108 = vrot.slane %v107, 2
    %v109 = vadd.f32 %v107, %v108
    %v110 = vrot.slane %v109, 1
    %v111 = vadd.f32 %v109, %v110
    %v112 = vmul.f32 %v111, %v102
    %v113 = vadd.f32 %v112, 1e-05
    %v114 = vrsqrt.pop %v113
    %v115 = vmul.f32 %v114, %v113
    %v116 = vmul.f32 %v115, %v114
    %v117 = vmul.f32 0.5, %v116
    %v118 = vsub.f32 1.5, %v117
    %v119 = vmul.f32 %v114, %v118
    %vm120 = vweird.f32 %v113
    %vm121 = vweird.f32 %v114
    %vm122 = vmor %vm120, %vm121
    %v123 = vsel %vm122, %v114, %v119
    %v124 = vmul.f32 %v60, %v123
    %v125 = vperm.slane %v124, 0
    %v126 = vmul.f32 %v104, %v125
    %v127 = vperm.slane %v60, 1
    %v128 = vadd.f32 %v126, %v127
    %v129 = vmax.f32 %v128, 0.0
    %s130 = scalar_lea.vmem [#allocation4], 64
    %v131 = vld [vmem:[%s130] sm:$0xff]
    %v132 = vld [vmem:[%s130 + $0x8] sm:$0xff]
    %v133 = vld [vmem:[%s130 + $0x10] sm:$0xff]
    %v134 = vld [vmem:[%s130 + $0x18] sm:$0xff]
    %v135 = vld [vmem:[%s130 + $0x20] sm:$0xff]
    %v136 = vld [vmem:[%s130 + $0x28] sm:$0xff]
    %v137 = vld [vmem:[%s130 + $0x30] sm:$0xff]
    %v138 = vld [vmem:[%s130 + $0x38] sm:$0xff]
    %vm139 = vcmask 523264
    %v141 = vsel %vm139, %v129, 0
    %143 = vmatpush.msra.mxu0 0.0
    %144 = vmatpush.msra.mxu0 0.0
    %145 = vmatpush.msra.mxu0 0.0
    %146 = vmatpush.msra.mxu0 0.0
    %147 = vmatpush.msra.mxu0 0.0
    %148 = vmatpush.msra.mxu0 0.0
    %149 = vmatpush.msra.mxu0 0.0
    %150 = vmatpush.msra.mxu0 0.0
    %151 = vmatpush.msra.mxu0 %v138
    %152 = vmatpush.msra.mxu0 %v137
    %153 = vmatpush.msra.mxu0 %v136
    %154 = vmatpush.msra.mxu0 %v135
    %155 = vmatpush.msra.mxu0 %v134
    %156 = vmatpush.msra.mxu0 %v133
    %157 = vmatpush.msra.mxu0 %v132
    %158 = vmatpush.msra.mxu0 %v131
    %159 = vmatmul.f32.gmra.mxu0 %v141
    %v160 = vpop.f32.mrf.mxu0
    %v161 = vadd.f32 0.0, %v160
    %162 = vdwg.mxu0
    %v163 = vrot.slane %v161, 4
    %v164 = vadd.f32 %v161, %v163
    %v165 = vrot.slane %v164, 2
    %v166 = vadd.f32 %v164, %v165
    %v167 = vrot.slane %v166, 1
    %v168 = vadd.f32 %v166, %v167
    %v169 = vmul.f32 %v168, %v102
    %v170 = vsub.f32 %v161, %v169
    %v171 = vmul.f32 %v170, %v170
    %v172 = vrot.slane %v171, 4
    %v173 = vadd.f32 %v171, %v172
    %v174 = vrot.slane %v173, 2
    %v175 = vadd.f32 %v173, %v174
    %v176 = vrot.slane %v175, 1
    %v177 = vadd.f32 %v175, %v176
    %v178 = vmul.f32 %v177, %v102
    %v179 = vadd.f32 %v178, 1e-05
    %v180 = vrsqrt.pop %v179
    %v181 = vmul.f32 %v180, %v179
    %v182 = vmul.f32 %v181, %v180
    %v183 = vmul.f32 0.5, %v182
    %v184 = vsub.f32 1.5, %v183
    %v185 = vmul.f32 %v180, %v184
    %vm186 = vweird.f32 %v179
    %vm187 = vweird.f32 %v180
    %vm188 = vmor %vm186, %vm187
    %v189 = vsel %vm188, %v180, %v185
    %v190 = vmul.f32 %v60, %v189
    %v191 = vperm.slane %v190, 2
    %v192 = vmul.f32 %v170, %v191
    %v193 = vperm.slane %v60, 3
    %v194 = vadd.f32 %v192, %v193
    %v195 = vmax.f32 %v194, 0.0
    %s196 = scalar_lea.vmem [#allocation4], 128
    %v197 = vld [vmem:[%s196] sm:$0xff]
    %v198 = vld [vmem:[%s196 + $0x8] sm:$0xff]
    %v199 = vld [vmem:[%s196 + $0x10] sm:$0xff]
    %v200 = vld [vmem:[%s196 + $0x18] sm:$0xff]
    %v201 = vld [vmem:[%s196 + $0x20] sm:$0xff]
    %v202 = vld [vmem:[%s196 + $0x28] sm:$0xff]
    %v203 = vld [vmem:[%s196 + $0x30] sm:$0xff]
    %v204 = vld [vmem:[%s196 + $0x38] sm:$0xff]
    %v205 = vperm.slane %v60, 4
    %v207 = vsel %vm139, %v195, 0
    %209 = vmatpush.msra.mxu0 0.0
    %210 = vmatpush.msra.mxu0 0.0
    %211 = vmatpush.msra.mxu0 0.0
    %212 = vmatpush.msra.mxu0 0.0
    %213 = vmatpush.msra.mxu0 0.0
    %214 = vmatpush.msra.mxu0 0.0
    %215 = vmatpush.msra.mxu0 0.0
    %216 = vmatpush.msra.mxu0 0.0
    %217 = vmatpush.msra.mxu0 %v204
    %218 = vmatpush.msra.mxu0 %v203
    %219 = vmatpush.msra.mxu0 %v202
    %220 = vmatpush.msra.mxu0 %v201
    %221 = vmatpush.msra.mxu0 %v200
    %222 = vmatpush.msra.mxu0 %v199
    %223 = vmatpush.msra.mxu0 %v198
    %224 = vmatpush.msra.mxu0 %v197
    %225 = vmatmul.f32.gmra.mxu0 %v207
    %v226 = vpop.f32.mrf.mxu0
    %v227 = vadd.f32 %v205, %v226
    %228 = vdwg.mxu0
    %s229 = scalar_lea.vmem [#allocation4], 192
    %v230 = vld [vmem:[%s229] sm:$0xff]
    %v231 = vld [vmem:[%s229 + $0x8] sm:$0xff]
    %v232 = vld [vmem:[%s229 + $0x10] sm:$0xff]
    %v233 = vld [vmem:[%s229 + $0x18] sm:$0xff]
    %v234 = vld [vmem:[%s229 + $0x20] sm:$0xff]
    %v235 = vld [vmem:[%s229 + $0x28] sm:$0xff]
    %v236 = vld [vmem:[%s229 + $0x30] sm:$0xff]
    %v237 = vld [vmem:[%s229 + $0x38] sm:$0xff]
    %v239 = vsel %vm139, %v227, 0
    %241 = vmatpush.msra.mxu0 0.0
    %242 = vmatpush.msra.mxu0 0.0
    %243 = vmatpush.msra.mxu0 0.0
    %244 = vmatpush.msra.mxu0 0.0
    %245 = vmatpush.msra.mxu0 0.0
    %246 = vmatpush.msra.mxu0 0.0
    %247 = vmatpush.msra.mxu0 0.0
    %248 = vmatpush.msra.mxu0 0.0
    %249 = vmatpush.msra.mxu0 %v237
    %250 = vmatpush.msra.mxu0 %v236
    %251 = vmatpush.msra.mxu0 %v235
    %252 = vmatpush.msra.mxu0 %v234
    %253 = vmatpush.msra.mxu0 %v233
    %254 = vmatpush.msra.mxu0 %v232
    %255 = vmatpush.msra.mxu0 %v231
    %256 = vmatpush.msra.mxu0 %v230
    %257 = vmatmul.f32.gmra.mxu0 %v239
    %v258 = vpop.f32.mrf.mxu0
    %v259 = vadd.f32 0.0, %v258
    %260 = vdwg.mxu0
    %v261 = vrot.slane %v259, 4
    %v262 = vadd.f32 %v259, %v261
    %v263 = vrot.slane %v262, 2
    %v264 = vadd.f32 %v262, %v263
    %v265 = vrot.slane %v264, 1
    %v266 = vadd.f32 %v264, %v265
    %v267 = vmul.f32 %v266, %v102
    %v268 = vsub.f32 %v259, %v267
    %v269 = vmul.f32 %v268, %v268
    %v270 = vrot.slane %v269, 4
    %v271 = vadd.f32 %v269, %v270
    %v272 = vrot.slane %v271, 2
    %v273 = vadd.f32 %v271, %v272
    %v274 = vrot.slane %v273, 1
    %v275 = vadd.f32 %v273, %v274
    %v276 = vmul.f32 %v275, %v102
    %v277 = vadd.f32 %v276, 1e-05
    %v278 = vrsqrt.pop %v277
    %v279 = vmul.f32 %v278, %v277
    %v280 = vmul.f32 %v279, %v278
    %v281 = vmul.f32 0.5, %v280
    %v282 = vsub.f32 1.5, %v281
    %v283 = vmul.f32 %v278, %v282
    %vm284 = vweird.f32 %v277
    %vm285 = vweird.f32 %v278
    %vm286 = vmor %vm284, %vm285
    %v287 = vsel %vm286, %v278, %v283
    %v288 = vmul.f32 %v60, %v287
    %v289 = vperm.slane %v288, 5
    %v290 = vmul.f32 %v268, %v289
    %v291 = vperm.slane %v60, 6
    %v292 = vadd.f32 %v290, %v291
    %v293 = vmax.f32 %v292, 0.0
    %s294 = scalar_lea.vmem [#allocation4], 256
    %v295 = vld [vmem:[%s294] sm:$0xff]
    %v296 = vld [vmem:[%s294 + $0x8] sm:$0xff]
    %v297 = vld [vmem:[%s294 + $0x10] sm:$0xff]
    %v298 = vld [vmem:[%s294 + $0x18] sm:$0xff]
    %v299 = vld [vmem:[%s294 + $0x20] sm:$0xff]
    %v300 = vld [vmem:[%s294 + $0x28] sm:$0xff]
    %v301 = vld [vmem:[%s294 + $0x30] sm:$0xff]
    %v302 = vld [vmem:[%s294 + $0x38] sm:$0xff]
    %v304 = vsel %vm139, %v293, 0
    %306 = vmatpush.msra.mxu0 0.0
    %307 = vmatpush.msra.mxu0 0.0
    %308 = vmatpush.msra.mxu0 0.0
    %309 = vmatpush.msra.mxu0 0.0
    %310 = vmatpush.msra.mxu0 0.0
    %311 = vmatpush.msra.mxu0 0.0
    %312 = vmatpush.msra.mxu0 0.0
    %313 = vmatpush.msra.mxu0 0.0
    %314 = vmatpush.msra.mxu0 %v302
    %315 = vmatpush.msra.mxu0 %v301
    %316 = vmatpush.msra.mxu0 %v300
    %317 = vmatpush.msra.mxu0 %v299
    %318 = vmatpush.msra.mxu0 %v298
    %319 = vmatpush.msra.mxu0 %v297
    %320 = vmatpush.msra.mxu0 %v296
    %321 = vmatpush.msra.mxu0 %v295
    %322 = vmatmul.f32.gmra.mxu0 %v304
    %v323 = vpop.f32.mrf.mxu0
    %v324 = vadd.f32 0.0, %v323
    %325 = vdwg.mxu0
    %v326 = vrot.slane %v324, 4
    %v327 = vadd.f32 %v324, %v326
    %v328 = vrot.slane %v327, 2
    %v329 = vadd.f32 %v327, %v328
    %v330 = vrot.slane %v329, 1
    %v331 = vadd.f32 %v329, %v330
    %v332 = vmul.f32 %v331, %v102
    %v333 = vsub.f32 %v324, %v332
    %v334 = vmul.f32 %v333, %v333
    %v335 = vrot.slane %v334, 4
    %v336 = vadd.f32 %v334, %v335
    %v337 = vrot.slane %v336, 2
    %v338 = vadd.f32 %v336, %v337
    %v339 = vrot.slane %v338, 1
    %v340 = vadd.f32 %v338, %v339
    %v341 = vmul.f32 %v340, %v102
    %v342 = vadd.f32 %v341, 1e-05
    %v343 = vrsqrt.pop %v342
    %v344 = vmul.f32 %v343, %v342
    %v345 = vmul.f32 %v344, %v343
    %v346 = vmul.f32 0.5, %v345
    %v347 = vsub.f32 1.5, %v346
    %v348 = vmul.f32 %v343, %v347
    %vm349 = vweird.f32 %v342
    %vm350 = vweird.f32 %v343
    %vm351 = vmor %vm349, %vm350
    %v352 = vsel %vm351, %v343, %v348
    %v353 = vmul.f32 %v60, %v352
    %v354 = vperm.slane %v353, 7
    %v355 = vmul.f32 %v333, %v354
    %v356 = vperm.slane %v61, 0
    %v357 = vadd.f32 %v355, %v356
    %v358 = vmax.f32 %v357, 0.0
    %s359 = scalar_lea.vmem [#allocation4], 320
    %v360 = vld [vmem:[%s359] sm:$0xff]
    %v361 = vld [vmem:[%s359 + $0x8] sm:$0xff]
    %v362 = vld [vmem:[%s359 + $0x10] sm:$0xff]
    %v363 = vld [vmem:[%s359 + $0x18] sm:$0xff]
    %v364 = vld [vmem:[%s359 + $0x20] sm:$0xff]
    %v365 = vld [vmem:[%s359 + $0x28] sm:$0xff]
    %v366 = vld [vmem:[%s359 + $0x30] sm:$0xff]
    %v367 = vld [vmem:[%s359 + $0x38] sm:$0xff]
    %v368 = vperm.slane %v61, 1
    %v370 = vsel %vm139, %v358, 0
    %372 = vmatpush.msra.mxu0 0.0
    %373 = vmatpush.msra.mxu0 0.0
    %374 = vmatpush.msra.mxu0 0.0
    %375 = vmatpush.msra.mxu0 0.0
    %376 = vmatpush.msra.mxu0 0.0
    %377 = vmatpush.msra.mxu0 0.0
    %378 = vmatpush.msra.mxu0 0.0
    %379 = vmatpush.msra.mxu0 0.0
    %380 = vmatpush.msra.mxu0 %v367
    %381 = vmatpush.msra.mxu0 %v366
    %382 = vmatpush.msra.mxu0 %v365
    %383 = vmatpush.msra.mxu0 %v364
    %384 = vmatpush.msra.mxu0 %v363
    %385 = vmatpush.msra.mxu0 %v362
    %386 = vmatpush.msra.mxu0 %v361
    %387 = vmatpush.msra.mxu0 %v360
    %388 = vmatmul.f32.gmra.mxu0 %v370
    %v389 = vpop.f32.mrf.mxu0
    %v390 = vadd.f32 %v368, %v389
    %391 = vdwg.mxu0
    %v392 = vlaneseq
    %v393 = vand.u32 %v392, 127
    %vm394 = vcmp.ge.s32.totalorder %v393, 32
    %vm395 = vcmp.lt.s32.totalorder %v393, 36
    %vm396 = vmand %vm394, %vm395
    %v397 = vsel %vm396, %v227, 0.0
    %v398 = vadd.f32 %v390, %v397
    %399 = vst [vmem:[%s3] sm:$0xff] %v398
    // Predicated region
    $region26: #{emotion_component_separator.1} parent=1 // pred_check
      _
    $region27: #{emotion_component_separator.1} parent=1 // pred_check_branch
      %401 = sbr.rel (0) target = $region29
    $region28: #{emotion_component_separator.1} parent=1 // pred_region
      _
    $region29: #{emotion_component_separator.1} parent=1 // pred_fallthru
      _
    // Predicated region
    $region30: #{emotion_component_separator.1} parent=1 // pred_check
      _
    $region31: #{emotion_component_separator.1} parent=1 // pred_check_branch
      %403 = sbr.rel (0) target = $region33
    $region32: #{emotion_component_separator.1} parent=1 // pred_region
      _
    $region33: #{emotion_component_separator.1} parent=1 // pred_fallthru
      _
    %404 = vsyncpa [#allocation3], 1
    %405 = vsyncpa [#allocation5], 1

</llo_original>
